<compile_context>
chip_gen: v5e
topology: v5e:2x2
jax: 0.10.0
libtpu: 0.0.40
codegen_flags: <defaults>
</compile_context>

<pallas_src>
import functools

import jax
import jax.numpy as jnp
from jax.experimental import pallas as pl
from jax.experimental.pallas import tpu as pltpu


def _round_up(v, m):
    return ((v + m - 1) // m) * m


def _pick_batch_tile(b, min_tile):
    """Pick (tile, padded_batch) from a ladder capped at 128.

    Score = padded rows + ~16 rows-equivalent per extra grid step, so we avoid
    both 2x padding waste (batches just past a boundary) and pathologically
    small tiles (grid overhead / small-M MXU inefficiency).  Cap of 128 keeps
    grid >= 2 for b > 128 so the "parallel" axis shards across both v7x TCs.
    """
    best = None
    for t in (128, 64, 32, 16, 8):
        if t < min_tile:
            continue
        b_pad = _round_up(b, t)
        score = b_pad + 16 * (b_pad // t)
        if best is None or score < best[0]:
            best = (score, t, b_pad)
    return best[1], best[2]


def _resident(shape):
    """Constant-index (grid-resident) operand: single-buffered.

    Avoids the default double-buffering of weights that never change across
    grid steps -- halves the weight VMEM footprint (matters on v7x, 64 MiB/TC).
    """
    return pl.BlockSpec(shape, lambda i: (0,) * len(shape),
                        pipeline_mode=pl.Buffered(1))


def _fc_kernel(x_ref, w1_ref, b1_ref, w2_ref, b2_ref, w3_ref, b3_ref, o_ref):
    """Fused fc1 -> relu -> fc2 -> relu -> fc_out for one batch tile.

    x_ref:  (TB, Dp)   input tile in its storage dtype (e.g. int8), Dp = K pad
    w1_ref: (Dp, F1)   resident weights in compute dtype (zero-padded K rows)
    b1_ref: (1, F1)    f32
    w2_ref: (F1, F2)   compute dtype
    b2_ref: (1, F2)    f32
    w3_ref: (F2, 1)    compute dtype
    b3_ref: (1,)       f32 scalar in SMEM
    o_ref:  (1, 1, TB) lane-dense output row for this tile, f32
    """
    cdt = w1_ref.dtype
    # Single direct cast on-chip (keeps the HBM stream at storage width).
    x = x_ref[...].astype(cdt)

    h1 = jnp.dot(x, w1_ref[...], preferred_element_type=jnp.float32) + b1_ref[...]
    h1 = jnp.maximum(h1, 0.0)
    if h1.dtype != cdt:
        h1 = h1.astype(cdt)

    h2 = jnp.dot(h1, w2_ref[...], preferred_element_type=jnp.float32) + b2_ref[...]
    h2 = jnp.maximum(h2, 0.0)
    if h2.dtype != cdt:
        h2 = h2.astype(cdt)

    # MXU-natural fc_out: (TB, F2) @ (F2, 1) -> (TB, 1).  Only the tiny result
    # column is transposed (XLU) into the lane-dense (1, TB) output row; the
    # big (TB, F2) activation never goes through a cross-lane transpose.
    y = jnp.dot(h2, w3_ref[...], preferred_element_type=jnp.float32)  # (TB, 1)
    o_ref[0] = y.T + b3_ref[0]


@functools.partial(
    jax.jit, static_argnames=("state_dim", "one_hot_depth", "compute_dtype")
)
def fc_model_forward(states_nnet, params, *, state_dim, one_hot_depth,
                     compute_dtype=None):
    """Pallas implementation of FCModel.forward."""
    w1, b1, w2, b2, w3, b3 = params
    d_in = state_dim * one_hot_depth
    f1 = w1.shape[1]
    f2 = w2.shape[1]

    if compute_dtype is None:
        # Tiny models: stay f32 (no bf16<->f32 VALU casts; exact numerics).
        # Large (DeepCubeA-scale) models: bf16 MXU operands, f32 accumulation.
        n_weight_elems = d_in * f1 + f1 * f2 + f2
        compute_dtype = jnp.float32 if n_weight_elems < (1 << 18) else jnp.bfloat16

    # x.view(-1, state_dim*one_hot_depth): reshape only; keep storage dtype
    # (the kernel casts each tile on-chip).
    x = states_nnet.reshape(-1, d_in)
    b = x.shape[0]

    # Minimum batch tile keeps the sub-32-bit input block sublane-aligned.
    itemsize = jnp.dtype(x.dtype).itemsize
    min_tile = 32 if itemsize == 1 else (16 if itemsize == 2 else 8)
    tb, b_pad = _pick_batch_tile(b, min_tile)
    n_blocks = b_pad // tb

    # Lane-align the feature (K) dim once on the host: zero one-hot columns /
    # zero w1 rows are numerically exact and give unmasked aligned loads.
    d_pad = _round_up(d_in, 128)
    pad_rows = b_pad - b
    pad_cols = d_pad - d_in
    if pad_rows or pad_cols:
        x = jnp.pad(x, ((0, pad_rows), (0, pad_cols)))

    # Weights as (in, out) in the compute dtype; biases stay f32; fc_out bias
    # is a scalar passed through SMEM.
    w1c = w1.astype(compute_dtype)
    if pad_cols:
        w1c = jnp.pad(w1c, ((0, pad_cols), (0, 0)))
    w2c = w2.astype(compute_dtype)
    w3c = w3.astype(compute_dtype)                   # (f2, 1)
    b1r = b1.reshape(1, f1).astype(jnp.float32)
    b2r = b2.reshape(1, f2).astype(jnp.float32)
    b3s = b3.reshape(1).astype(jnp.float32)

    cdt_bytes = jnp.dtype(compute_dtype).itemsize
    cost = pl.CostEstimate(
        flops=2 * b_pad * (d_pad * f1 + f1 * f2 + f2),
        transcendentals=0,
        bytes_accessed=(b_pad * d_pad * itemsize
                        + (d_pad * f1 + f1 * f2 + f2) * cdt_bytes
                        + (f1 + f2 + 1) * 4
                        + b_pad * 4),
    )

    out = pl.pallas_call(
        _fc_kernel,
        out_shape=jax.ShapeDtypeStruct((n_blocks, 1, tb), jnp.float32),
        grid_spec=pltpu.PrefetchScalarGridSpec(
            num_scalar_prefetch=0,
            grid=(n_blocks,),
            in_specs=[
                pl.BlockSpec((tb, d_pad), lambda i: (i, 0)),   # x tile (streamed)
                _resident((d_pad, f1)),                        # w1
                _resident((1, f1)),                            # b1
                _resident((f1, f2)),                           # w2
                _resident((1, f2)),                            # b2
                _resident((f2, 1)),                            # w3
                pl.BlockSpec(memory_space=pltpu.MemorySpace.SMEM),  # b3 scalar
            ],
            out_specs=pl.BlockSpec((1, 1, tb), lambda i: (i, 0, 0)),
        ),
        compiler_params=pltpu.CompilerParams(
            dimension_semantics=("parallel",),
            vmem_limit_bytes=48 * 1024 * 1024,   # v7x headroom; lifts v5e 16MiB default
        ),
        cost_estimate=cost,
    )(x, w1c, b1r, w2c, b2r, w3c, b3s)

    return out.reshape(-1)[:b].reshape(b, 1)


def init_params(key, state_dim, one_hot_depth, fc1_dim, fc2_dim):
    """Deterministic parameter init (PyTorch-Linear-like uniform fan-in)."""
    d_in = state_dim * one_hot_depth
    keys = jax.random.split(key, 6)

    def linear(kw, kb, fan_in, fan_out):
        bound = 1.0 / jnp.sqrt(fan_in)
        # Stored as (in, out) for the kernel.
        w = jax.random.uniform(kw, (fan_in, fan_out), jnp.float32, -bound, bound)
        b = jax.random.uniform(kb, (fan_out,), jnp.float32, -bound, bound)
        return w, b

    w1, b1 = linear(keys[0], keys[1], d_in, fc1_dim)
    w2, b2 = linear(keys[2], keys[3], fc1_dim, fc2_dim)
    w3, b3 = linear(keys[4], keys[5], fc2_dim, 1)
    return (w1, b1, w2, b2, w3, b3)


def _reference(states_nnet, params, state_dim, one_hot_depth):
    w1, b1, w2, b2, w3, b3 = params
    x = states_nnet.astype(jnp.float32).reshape(-1, state_dim * one_hot_depth)
    x = jnp.maximum(x @ w1 + b1, 0.0)
    x = jnp.maximum(x @ w2 + b2, 0.0)
    return x @ w3 + b3


if __name__ == "__main__":
    state_dim = 8
    one_hot_depth = 4
    fc1_dim = 64
    fc2_dim = 32
    batch = 2

    key = jax.random.PRNGKey(0)
    k_params, k_x = jax.random.split(key)

    params = init_params(k_params, state_dim, one_hot_depth, fc1_dim, fc2_dim)

    # Integer one-hot-ish states stored narrow (int8); the kernel casts on-chip.
    states = jax.random.randint(
        k_x, (batch, state_dim, one_hot_depth), 0, 2, dtype=jnp.int32
    ).astype(jnp.int8)

    ref = _reference(states, params, state_dim, one_hot_depth)

    # Default path (auto-selects f32 at these tiny widths): tight check.
    out_auto = fc_model_forward(
        states, params, state_dim=state_dim, one_hot_depth=one_hot_depth
    )
    out_auto = jax.block_until_ready(out_auto)
    assert out_auto.shape == (batch, 1), out_auto.shape
    assert jnp.allclose(out_auto, ref, atol=1e-5, rtol=1e-5), (out_auto, ref)

    # Explicit bf16 path (DeepCubeA-scale default): loose check.
    out_bf16 = fc_model_forward(
        states, params, state_dim=state_dim, one_hot_depth=one_hot_depth,
        compute_dtype=jnp.bfloat16,
    )
    out_bf16 = jax.block_until_ready(out_bf16)
    assert jnp.allclose(out_bf16, ref, atol=5e-2, rtol=5e-2), (out_bf16, ref)

    print("KERNEL_OK")
</pallas_src>

<mosaic_0001>
module attributes {stable_mosaic.version = 11 : i64} {
  func.func @_fc_kernel(%arg0: i32, %arg1: memref<32x128xi8, #tpu.memory_space<vmem>>, %arg2: memref<128x64xf32, #tpu.memory_space<vmem>>, %arg3: memref<1x64xf32, #tpu.memory_space<vmem>>, %arg4: memref<64x32xf32, #tpu.memory_space<vmem>>, %arg5: memref<1x32xf32, #tpu.memory_space<vmem>>, %arg6: memref<32x1xf32, #tpu.memory_space<vmem>>, %arg7: memref<1xf32, #tpu.memory_space<smem>>, %arg8: memref<1x1x32xf32, #tpu.memory_space<vmem>>) attributes {dimension_semantics = [#tpu.dimension_semantics<parallel>], iteration_bounds = array<i64: 1>, scalar_prefetch = 0 : i64, scratch_operands = 0 : i64, tpu.core_type = #tpu.core_type<tc>, window_params = [{transform_indices = @transform_0, window_bounds = array<i64: 32, 128>}, {pipeline_mode = #tpu.pipeline_mode<synchronous>, transform_indices = @transform_1, window_bounds = array<i64: 128, 64>}, {pipeline_mode = #tpu.pipeline_mode<synchronous>, transform_indices = @transform_2, window_bounds = array<i64: 1, 64>}, {pipeline_mode = #tpu.pipeline_mode<synchronous>, transform_indices = @transform_3, window_bounds = array<i64: 64, 32>}, {pipeline_mode = #tpu.pipeline_mode<synchronous>, transform_indices = @transform_4, window_bounds = array<i64: 1, 32>}, {pipeline_mode = #tpu.pipeline_mode<synchronous>, transform_indices = @transform_5, window_bounds = array<i64: 32, 1>}, {transform_indices = @transform_6, window_bounds = array<i64: 1>}, {transform_indices = @transform_7, window_bounds = array<i64: 1, 1, 32>}]} {
    %c0 = arith.constant 0 : index
    %c0_0 = arith.constant 0 : index
    %0 = vector.load %arg1[%c0, %c0_0] : memref<32x128xi8, #tpu.memory_space<vmem>>, vector<32x128xi8>
    %1 = arith.sitofp %0 : vector<32x128xi8> to vector<32x128xf32>
    %c0_1 = arith.constant 0 : index
    %c0_2 = arith.constant 0 : index
    %2 = vector.load %arg2[%c0_1, %c0_2] : memref<128x64xf32, #tpu.memory_space<vmem>>, vector<128x64xf32>
    %cst = arith.constant dense<0.000000e+00> : vector<32x64xf32>
    %3 = tpu.matmul %1, %2, %cst {dimension_numbers = #tpu.dot_dimension_numbers<[1], [0], [0], [1], [0, 0, 1, 1], [], []>} : vector<32x128xf32>, vector<128x64xf32>, vector<32x64xf32> -> vector<32x64xf32>
    %c0_3 = arith.constant 0 : index
    %c0_4 = arith.constant 0 : index
    %4 = vector.load %arg3[%c0_3, %c0_4] : memref<1x64xf32, #tpu.memory_space<vmem>>, vector<1x64xf32>
    %5 = vector.broadcast %4 : vector<1x64xf32> to vector<32x64xf32>
    %6 = arith.addf %3, %5 : vector<32x64xf32>
    %cst_5 = arith.constant 0.000000e+00 : f32
    %7 = vector.broadcast %cst_5 : f32 to vector<32x64xf32>
    %8 = arith.maximumf %6, %7 : vector<32x64xf32>
    %c0_6 = arith.constant 0 : index
    %c0_7 = arith.constant 0 : index
    %9 = vector.load %arg4[%c0_6, %c0_7] : memref<64x32xf32, #tpu.memory_space<vmem>>, vector<64x32xf32>
    %cst_8 = arith.constant dense<0.000000e+00> : vector<32x32xf32>
    %10 = tpu.matmul %8, %9, %cst_8 {dimension_numbers = #tpu.dot_dimension_numbers<[1], [0], [0], [1], [0, 0, 1, 1], [], []>} : vector<32x64xf32>, vector<64x32xf32>, vector<32x32xf32> -> vector<32x32xf32>
    %c0_9 = arith.constant 0 : index
    %c0_10 = arith.constant 0 : index
    %11 = vector.load %arg5[%c0_9, %c0_10] : memref<1x32xf32, #tpu.memory_space<vmem>>, vector<1x32xf32>
    %12 = vector.broadcast %11 : vector<1x32xf32> to vector<32x32xf32>
    %13 = arith.addf %10, %12 : vector<32x32xf32>
    %cst_11 = arith.constant 0.000000e+00 : f32
    %14 = vector.broadcast %cst_11 : f32 to vector<32x32xf32>
    %15 = arith.maximumf %13, %14 : vector<32x32xf32>
    %c0_12 = arith.constant 0 : index
    %c0_13 = arith.constant 0 : index
    %16 = vector.load %arg6[%c0_12, %c0_13] : memref<32x1xf32, #tpu.memory_space<vmem>>, vector<32x1xf32>
    %cst_14 = arith.constant dense<0.000000e+00> : vector<32x1xf32>
    %17 = tpu.matmul %15, %16, %cst_14 {dimension_numbers = #tpu.dot_dimension_numbers<[1], [0], [0], [1], [0, 0, 1, 1], [], []>} : vector<32x32xf32>, vector<32x1xf32>, vector<32x1xf32> -> vector<32x1xf32>
    %18 = tpu.transpose %17, [1, 0] : vector<32x1xf32> -> vector<1x32xf32>
    %c0_15 = arith.constant 0 : index
    %19 = memref.load %arg7[%c0_15] : memref<1xf32, #tpu.memory_space<smem>>
    %20 = vector.broadcast %19 : f32 to vector<1x32xf32>
    %21 = arith.addf %18, %20 : vector<1x32xf32>
    %c0_16 = arith.constant 0 : index
    %c0_17 = arith.constant 0 : index
    %c0_18 = arith.constant 0 : index
    %22 = vector.load %arg8[%c0_16, %c0_17, %c0_18] : memref<1x1x32xf32, #tpu.memory_space<vmem>>, vector<1x1x32xf32>
    %23 = vector.shape_cast %22 : vector<1x1x32xf32> to vector<1x32xf32>
    %24 = vector.shape_cast %21 : vector<1x32xf32> to vector<1x1x32xf32>
    tpu.vector_store %arg8[%c0_16, %c0_17, %c0_18], %24 {strides = array<i32>} : memref<1x1x32xf32, #tpu.memory_space<vmem>>, vector<1x1x32xf32>,
    return
  }
  func.func @transform_0(%arg0: i32) -> (i32, i32) {
    %c0_i32 = arith.constant 0 : i32
    %c0_i32_0 = arith.constant 0 : i32
    return %arg0, %c0_i32 : i32, i32
  }
  func.func @transform_1(%arg0: i32) -> (i32, i32) {
    %c0_i32 = arith.constant 0 : i32
    %c0_i32_0 = arith.constant 0 : i32
    %c0_i32_1 = arith.constant 0 : i32
    return %c0_i32, %c0_i32_0 : i32, i32
  }
  func.func @transform_2(%arg0: i32) -> (i32, i32) {
    %c0_i32 = arith.constant 0 : i32
    %c0_i32_0 = arith.constant 0 : i32
    %c0_i32_1 = arith.constant 0 : i32
    return %c0_i32, %c0_i32_0 : i32, i32
  }
  func.func @transform_3(%arg0: i32) -> (i32, i32) {
    %c0_i32 = arith.constant 0 : i32
    %c0_i32_0 = arith.constant 0 : i32
    %c0_i32_1 = arith.constant 0 : i32
    return %c0_i32, %c0_i32_0 : i32, i32
  }
  func.func @transform_4(%arg0: i32) -> (i32, i32) {
    %c0_i32 = arith.constant 0 : i32
    %c0_i32_0 = arith.constant 0 : i32
    %c0_i32_1 = arith.constant 0 : i32
    return %c0_i32, %c0_i32_0 : i32, i32
  }
  func.func @transform_5(%arg0: i32) -> (i32, i32) {
    %c0_i32 = arith.constant 0 : i32
    %c0_i32_0 = arith.constant 0 : i32
    %c0_i32_1 = arith.constant 0 : i32
    return %c0_i32, %c0_i32_0 : i32, i32
  }
  func.func @transform_6(%arg0: i32) -> i32 {
    %c0_i32 = arith.constant 0 : i32
    %c0_i32_0 = arith.constant 0 : i32
    return %c0_i32 : i32
  }
  func.func @transform_7(%arg0: i32) -> (i32, i32, i32) {
    %c0_i32 = arith.constant 0 : i32
    %c0_i32_0 = arith.constant 0 : i32
    %c0_i32_1 = arith.constant 0 : i32
    return %arg0, %c0_i32, %c0_i32_0 : i32, i32, i32
  }
}

</mosaic_0001>

<llo_original>
// kernel: fc_model_forward.1
$region0: #{fc_model_forward.1}
  #allocation0 [shape = 'u32[]', space=smem, size = 0x4, offset = 0x4, fixed_abs, tag = 'smem constant byte address 0x4 - core index']
  #allocation1 [shape = 'u32[72,128]{1,0:T(1,128)}', space=vmem, size = 0x9000, scoped, tag = 'internal scratch']
  #allocation2 [shape = 'f32[1]{0:T(128)S(6)}', space=smem, size = 0x200, scoped, tag = 'scoped memory for fc_model_forward.1']
  %s0 = inlined_call_operand.vmem [shape: s8[32,128], index: 0, kind: input, shape index: {}]
  %s1 = inlined_call_operand.vmem [shape: f32[128,64], index: 1, kind: input, shape index: {}]
  %s2 = inlined_call_operand.vmem [shape: f32[1,64], index: 2, kind: input, shape index: {}]
  %s3 = inlined_call_operand.vmem [shape: f32[64,32], index: 3, kind: input, shape index: {}]
  %s4 = inlined_call_operand.vmem [shape: f32[1,32], index: 4, kind: input, shape index: {}]
  %s5 = inlined_call_operand.vmem [shape: f32[32,1], index: 5, kind: input, shape index: {}]
  %s6 = inlined_call_operand.<no memory space> [shape: f32[1], index: 6, kind: input, shape index: {}]
  %s7 = inlined_call_operand.vmem [shape: f32[1,1,32], index: 7, kind: output, shape index: {}]
  %s8 = sld [smem:[#allocation0]]
  $region38: #{fc_model_forward.1} parent=0
    _
  %s10 = ssub.s32 1, %s8
  %s11 = scalar_select 0, %s10, %s8
  %12 = sst [smem:[#allocation2]] %s6
  // Predicated region
  $region2: #{fc_model_forward.1} parent=0 // pred_check
    _
  $region3: #{fc_model_forward.1} parent=0 // pred_check_branch
    %14 = sbr.rel (0) target = $region5
  $region4: #{fc_model_forward.1} parent=0 // pred_region
    _
  $region5: #{fc_model_forward.1} parent=0 // pred_fallthru
    _
  // Predicated region
  $region6: #{fc_model_forward.1} parent=0 // pred_check
    _
  $region7: #{fc_model_forward.1} parent=0 // pred_check_branch
    %16 = sbr.rel (0) target = $region9
  $region8: #{fc_model_forward.1} parent=0 // pred_region
    _
  $region9: #{fc_model_forward.1} parent=0 // pred_fallthru
    _
  // Predicated region
  $region10: #{fc_model_forward.1} parent=0 // pred_check
    _
  $region11: #{fc_model_forward.1} parent=0 // pred_check_branch
    %18 = sbr.rel (0) target = $region13
  $region12: #{fc_model_forward.1} parent=0 // pred_region
    _
  $region13: #{fc_model_forward.1} parent=0 // pred_fallthru
    _
  // Predicated region
  $region14: #{fc_model_forward.1} parent=0 // pred_check
    _
  $region15: #{fc_model_forward.1} parent=0 // pred_check_branch
    %20 = sbr.rel (0) target = $region17
  $region16: #{fc_model_forward.1} parent=0 // pred_region
    _
  $region17: #{fc_model_forward.1} parent=0 // pred_fallthru
    _
  // Predicated region
  $region18: #{fc_model_forward.1} parent=0 // pred_check
    _
  $region19: #{fc_model_forward.1} parent=0 // pred_check_branch
    %22 = sbr.rel (0) target = $region21
  $region20: #{fc_model_forward.1} parent=0 // pred_region
    _
  $region21: #{fc_model_forward.1} parent=0 // pred_fallthru
    _
  // Predicated region
  $region22: #{fc_model_forward.1} parent=0 // pred_check
    _
  $region23: #{fc_model_forward.1} parent=0 // pred_check_branch
    %24 = sbr.rel (0) target = $region25
  $region24: #{fc_model_forward.1} parent=0 // pred_region
    _
  $region25: #{fc_model_forward.1} parent=0 // pred_fallthru
    _
  // Predicated region
  $region26: #{fc_model_forward.1} parent=0 // pred_check
    _
  $region27: #{fc_model_forward.1} parent=0 // pred_check_branch
    %26 = sbr.rel (0) target = $region29
  $region28: #{fc_model_forward.1} parent=0 // pred_region
    _
  $region29: #{fc_model_forward.1} parent=0 // pred_fallthru
    _
  %v27 = vld [vmem:[%s0] sm:$0xff]
  %v28 = vunpack.c.0.s8 %v27
  %v29 = vunpack.c.1.s8 %v27
  %v30 = vunpack.c.2.s8 %v27
  %v31 = vunpack.c.3.s8 %v27
  %v32 = vcvt.s32.f32 %v28
  %v33 = vcvt.s32.f32 %v29
  %v34 = vcvt.s32.f32 %v30
  %v35 = vcvt.s32.f32 %v31
  %v36 = vld [vmem:[%s1] sm:$0xff]
  %v37 = vld [vmem:[%s1 + $0x8] sm:$0xff]
  %v38 = vld [vmem:[%s1 + $0x10] sm:$0xff]
  %v39 = vld [vmem:[%s1 + $0x18] sm:$0xff]
  %v40 = vld [vmem:[%s1 + $0x20] sm:$0xff]
  %v41 = vld [vmem:[%s1 + $0x28] sm:$0xff]
  %v42 = vld [vmem:[%s1 + $0x30] sm:$0xff]
  %v43 = vld [vmem:[%s1 + $0x38] sm:$0xff]
  %v44 = vld [vmem:[%s1 + $0x40] sm:$0xff]
  %v45 = vld [vmem:[%s1 + $0x48] sm:$0xff]
  %v46 = vld [vmem:[%s1 + $0x50] sm:$0xff]
  %v47 = vld [vmem:[%s1 + $0x58] sm:$0xff]
  %v48 = vld [vmem:[%s1 + $0x60] sm:$0xff]
  %v49 = vld [vmem:[%s1 + $0x68] sm:$0xff]
  %v50 = vld [vmem:[%s1 + $0x70] sm:$0xff]
  %v51 = vld [vmem:[%s1 + $0x78] sm:$0xff]
  %v52 = vld [vmem:[%s2] sm:$0x1]
  %v54 = vperm.slane %v52, 0
  %56 = vmatpush.msra.mxu0 %v51
  %57 = vmatpush.msra.mxu0 %v50
  %58 = vmatpush.msra.mxu0 %v49
  %59 = vmatpush.msra.mxu0 %v48
  %60 = vmatpush.msra.mxu0 %v47
  %61 = vmatpush.msra.mxu0 %v46
  %62 = vmatpush.msra.mxu0 %v45
  %63 = vmatpush.msra.mxu0 %v44
  %64 = vmatpush.msra.mxu0 %v43
  %65 = vmatpush.msra.mxu0 %v42
  %66 = vmatpush.msra.mxu0 %v41
  %67 = vmatpush.msra.mxu0 %v40
  %68 = vmatpush.msra.mxu0 %v39
  %69 = vmatpush.msra.mxu0 %v38
  %70 = vmatpush.msra.mxu0 %v37
  %71 = vmatpush.msra.mxu0 %v36
  %72 = vmatmul.f32.gmra.mxu0 %v32
  %v73 = vpop.f32.mrf.mxu0
  %v74 = vadd.f32 %v54, %v73
  %75 = vmatmul.f32.gmra.mxu0 %v33
  %v76 = vpop.f32.mrf.mxu0
  %v77 = vadd.f32 %v54, %v76
  %78 = vmatmul.f32.gmra.mxu0 %v34
  %v79 = vpop.f32.mrf.mxu0
  %v80 = vadd.f32 %v54, %v79
  %81 = vmatmul.f32.gmra.mxu0 %v35
  %v82 = vpop.f32.mrf.mxu0
  %v83 = vadd.f32 %v54, %v82
  %84 = vdwg.mxu0
  %v85 = vmax.f32 %v74, 0.0
  %v86 = vmax.f32 %v77, 0.0
  %v87 = vmax.f32 %v80, 0.0
  %v88 = vmax.f32 %v83, 0.0
  %v89 = vld [vmem:[%s3] sm:$0xff]
  %v90 = vld [vmem:[%s3 + $0x8] sm:$0xff]
  %v91 = vld [vmem:[%s3 + $0x10] sm:$0xff]
  %v92 = vld [vmem:[%s3 + $0x18] sm:$0xff]
  %v93 = vld [vmem:[%s3 + $0x20] sm:$0xff]
  %v94 = vld [vmem:[%s3 + $0x28] sm:$0xff]
  %v95 = vld [vmem:[%s3 + $0x30] sm:$0xff]
  %v96 = vld [vmem:[%s3 + $0x38] sm:$0xff]
  %v97 = vld [vmem:[%s4] sm:$0x1]
  %v99 = vperm.slane %v97, 0
  %vm101 = vcmask 523264
  %v103 = vsel %vm101, %v85, 0
  %v106 = vsel %vm101, %v86, 0
  %v109 = vsel %vm101, %v87, 0
  %v112 = vsel %vm101, %v88, 0
  %114 = vmatpush.msra.mxu0 0.0
  %115 = vmatpush.msra.mxu0 0.0
  %116 = vmatpush.msra.mxu0 0.0
  %117 = vmatpush.msra.mxu0 0.0
  %118 = vmatpush.msra.mxu0 0.0
  %119 = vmatpush.msra.mxu0 0.0
  %120 = vmatpush.msra.mxu0 0.0
  %121 = vmatpush.msra.mxu0 0.0
  %122 = vmatpush.msra.mxu0 %v96
  %123 = vmatpush.msra.mxu0 %v95
  %124 = vmatpush.msra.mxu0 %v94
  %125 = vmatpush.msra.mxu0 %v93
  %126 = vmatpush.msra.mxu0 %v92
  %127 = vmatpush.msra.mxu0 %v91
  %128 = vmatpush.msra.mxu0 %v90
  %129 = vmatpush.msra.mxu0 %v89
  %130 = vmatmul.f32.gmra.mxu0 %v103
  %v131 = vpop.f32.mrf.mxu0
  %v132 = vadd.f32 %v99, %v131
  %133 = vmatmul.f32.gmra.mxu0 %v106
  %v134 = vpop.f32.mrf.mxu0
  %v135 = vadd.f32 %v99, %v134
  %136 = vmatmul.f32.gmra.mxu0 %v109
  %v137 = vpop.f32.mrf.mxu0
  %v138 = vadd.f32 %v99, %v137
  %139 = vmatmul.f32.gmra.mxu0 %v112
  %v140 = vpop.f32.mrf.mxu0
  %v141 = vadd.f32 %v99, %v140
  %142 = vdwg.mxu0
  %v143 = vmax.f32 %v132, 0.0
  %v144 = vmax.f32 %v135, 0.0
  %v145 = vmax.f32 %v138, 0.0
  %v146 = vmax.f32 %v141, 0.0
  %v147 = vld [vmem:[%s5] sm:$0xff]
  %v148 = vld [vmem:[%s5 + $0x8] sm:$0xff]
  %v149 = vld [vmem:[%s5 + $0x10] sm:$0xff]
  %v150 = vld [vmem:[%s5 + $0x18] sm:$0xff]
  %vm151 = vcmask 261120
  %v153 = vsel %vm151, %v143, 0
  %v156 = vsel %vm151, %v144, 0
  %v159 = vsel %vm151, %v145, 0
  %v162 = vsel %vm151, %v146, 0
  %164 = vmatpush.msra.mxu0 0.0
  %165 = vmatpush.msra.mxu0 0.0
  %166 = vmatpush.msra.mxu0 0.0
  %167 = vmatpush.msra.mxu0 0.0
  %168 = vmatpush.msra.mxu0 0.0
  %169 = vmatpush.msra.mxu0 0.0
  %170 = vmatpush.msra.mxu0 0.0
  %171 = vmatpush.msra.mxu0 0.0
  %172 = vmatpush.msra.mxu0 0.0
  %173 = vmatpush.msra.mxu0 0.0
  %174 = vmatpush.msra.mxu0 0.0
  %175 = vmatpush.msra.mxu0 0.0
  %176 = vmatpush.msra.mxu0 %v150
  %177 = vmatpush.msra.mxu0 %v149
  %178 = vmatpush.msra.mxu0 %v148
  %179 = vmatpush.msra.mxu0 %v147
  %180 = vmatmul.f32.gmra.mxu0 %v153
  %v181 = vpop.f32.mrf.mxu0
  %v182 = vadd.f32 0.0, %v181
  %183 = vmatmul.f32.gmra.mxu0 %v156
  %v184 = vpop.f32.mrf.mxu0
  %v185 = vadd.f32 0.0, %v184
  %186 = vmatmul.f32.gmra.mxu0 %v159
  %v187 = vpop.f32.mrf.mxu0
  %v188 = vadd.f32 0.0, %v187
  %189 = vmatmul.f32.gmra.mxu0 %v162
  %v190 = vpop.f32.mrf.mxu0
  %v191 = vadd.f32 0.0, %v190
  %192 = vdwg.mxu0
  %193 = vxpose.xlu0.b32.start [1/16] %v182, 128
  %194 = vxpose.xlu0.b32.cont [2/16] %v185, 128
  %195 = vxpose.xlu0.b32.cont [3/16] %v188, 128
  %196 = vxpose.xlu0.b32.cont [4/16] %v191, 128
  %197 = vxpose.xlu0.b32.cont [5/16] 0.0, 128
  %198 = vxpose.xlu0.b32.cont [6/16] 0.0, 128
  %199 = vxpose.xlu0.b32.cont [7/16] 0.0, 128
  %200 = vxpose.xlu0.b32.cont [8/16] 0.0, 128
  %201 = vxpose.xlu0.b32.cont [9/16] 0.0, 128
  %202 = vxpose.xlu0.b32.cont [10/16] 0.0, 128
  %203 = vxpose.xlu0.b32.cont [11/16] 0.0, 128
  %204 = vxpose.xlu0.b32.cont [12/16] 0.0, 128
  %205 = vxpose.xlu0.b32.cont [13/16] 0.0, 128
  %206 = vxpose.xlu0.b32.cont [14/16] 0.0, 128
  %207 = vxpose.xlu0.b32.cont [15/16] 0.0, 128
  %208 = vxpose.xlu0.b32.end [16/16] 0.0, 128
  %v209 = vpop.trf.xlu0
  %v210 = vpop.trf.xlu0
  %v211 = vpop.trf.xlu0
  %v212 = vpop.trf.xlu0
  %v213 = vpop.trf.xlu0
  %v214 = vpop.trf.xlu0
  %v215 = vpop.trf.xlu0
  %v216 = vpop.trf.xlu0
  %v217 = vpop.trf.xlu0
  %v218 = vpop.trf.xlu0
  %v219 = vpop.trf.xlu0
  %v220 = vpop.trf.xlu0
  %v221 = vpop.trf.xlu0
  %v222 = vpop.trf.xlu0
  %v223 = vpop.trf.xlu0
  %v224 = vpop.trf.xlu0
  %s225 = sld [smem:[#allocation2]]
  %v226 = vstv %s225
  %v227 = vadd.f32 %v209, %v226
  %vm228 = vcmask 253952
  %229 = vst.msk [vmem:[%s7] sm:$0x1] %vm228, %v227
  // Predicated region
  $region30: #{fc_model_forward.1} parent=0 // pred_check
    _
  $region31: #{fc_model_forward.1} parent=0 // pred_check_branch
    %231 = sbr.rel (0) target = $region33
  $region32: #{fc_model_forward.1} parent=0 // pred_region
    _
  $region33: #{fc_model_forward.1} parent=0 // pred_fallthru
    _
  // Predicated region
  $region34: #{fc_model_forward.1} parent=0 // pred_check
    _
  $region35: #{fc_model_forward.1} parent=0 // pred_check_branch
    %233 = sbr.rel (0) target = $region37
  $region36: #{fc_model_forward.1} parent=0 // pred_region
    _
  $region37: #{fc_model_forward.1} parent=0 // pred_fallthru
    _

</llo_original>
